<compile_context>
chip_gen: v7x
topology: tpu7x:2x2x1
jax: 0.10.0
libtpu: 0.0.40
codegen_flags: <defaults>
</compile_context>

<pallas_src>
import jax
import jax.numpy as jnp
from jax.experimental import pallas as pl
from jax.experimental.pallas import tpu as pltpu


# --------------------------------------------------------------------------- #
# Kernel body: pure load -> fused multiply-add -> store.
# --------------------------------------------------------------------------- #
def _normalization_kernel(scale_ref, bias_ref, img_ref, out_ref):
    # scale_ref / bias_ref: (rb, 1) per-row channel constants (VMEM).
    # img_ref / out_ref:    (rb, lb) lane-dense tiles of the 2-D view.
    x = img_ref[...]
    out_ref[...] = (x * scale_ref[...] + bias_ref[...]).astype(out_ref.dtype)


# --------------------------------------------------------------------------- #
# Hardware / tiling helpers.
# --------------------------------------------------------------------------- #
def _round_up(x, m):
    return ((x + m - 1) // m) * m


def _sublane_multiple(itemsize):
    # f32 -> 8 rows/vreg, bf16/f16 -> 16, int8/fp8 -> 32 (packed sublanes).
    return max(8, 32 // max(1, itemsize))


def _vmem_limit_bytes():
    """~75% of the chip's physical VMEM; safe fallback = v7x's 64 MiB."""
    cap = None
    try:
        info = pltpu.get_tpu_info()
        cap = getattr(info, "vmem_capacity_bytes", None)
    except Exception:
        cap = None
    if not cap or cap <= 0:
        cap = 64 * 1024 * 1024  # v7x floor -> safe on every chip
    return int(cap) * 3 // 4


def _pick_block(rows, lanes, itemsize, *, target_bytes, vmem_budget_bytes):
    """Pick an (rb, lb) block: ~target_bytes, (8,128)-legal, lane-dense,
    double-buffered working set within vmem_budget_bytes."""
    sub = _sublane_multiple(itemsize)

    # ---- lane (last) dim: full extent, or a 128-multiple ideally dividing it.
    if lanes * itemsize <= target_bytes or lanes % 128 != 0:
        lb = lanes  # full extent (required when lanes % 128 != 0)
    else:
        cap = max(128, min(lanes, ((target_bytes // itemsize) // 128) * 128))
        lb = None
        for cand in range(cap, 127, -128):      # prefer lb that divides lanes
            if lanes % cand == 0:
                lb = cand
                break
        if lb is None:
            lb = cap                             # ragged last block, still 128-aligned

    # ---- row (second-to-last) dim.
    rows_cap = max(1, target_bytes // (lb * itemsize))
    if rows <= rows_cap:
        rb = rows
        # v7x has 2 TCs: avoid a (1,1) grid when rows can be split cleanly.
        if lb >= lanes and rows > sub:
            half = _round_up((rows + 1) // 2, sub)
            if half < rows:
                rb = half
    else:
        rb = min(rows, max(sub, (rows_cap // sub) * sub))

    # ---- enforce the double-buffered VMEM working set.
    def working_set(rb_, lb_):
        tile = rb_ * lb_ * itemsize
        consts = 2 * 2 * _round_up(rb_, 8) * 128 * 4  # 2 arrays x 2 buffers, lane-padded
        return 2 * tile + 2 * tile + consts            # in + out, double-buffered

    while working_set(rb, lb) > vmem_budget_bytes and rb > sub:
        new_rb = max(sub, ((rb // 2) // sub) * sub)
        if new_rb == rb:
            break
        rb = new_rb

    return rb, lb


# --------------------------------------------------------------------------- #
# Wrapper.
# --------------------------------------------------------------------------- #
def normalization(img, mean, std, *, donate=False):
    """(img - mean[:, None, None]) / std[:, None, None] over NCHW input."""
    N, C, H, W = img.shape
    assert mean.shape == (C,) and std.shape == (C,)

    itemsize = jnp.dtype(img.dtype).itemsize
    vmem_limit = _vmem_limit_bytes()                     # hw-derived (v5e/v6e/v7x)
    target_bytes = max(4 * 1024 * 1024, min(16 * 1024 * 1024, vmem_limit // 12))
    vmem_budget = vmem_limit * 3 // 4

    hw = H * W
    rows, lanes, rep = N * C, hw, 1
    # Fallback: large H*W that is not 128-divisible would force a huge
    # full-extent lane block -> refactor to (N*C*H, W) instead (constants
    # repeated H-fold).  Keeps the block bounded; lane masking (if W%128!=0)
    # is far cheaper than blowing the VMEM budget.
    if hw % 128 != 0 and hw * itemsize > target_bytes:
        rows, lanes, rep = N * C * H, W, H

    img2d = img.reshape(rows, lanes)

    # Per-row constants: out = x*scale + bias, scale = 1/std, bias = -mean/std.
    const_dtype = jnp.bfloat16 if img.dtype == jnp.bfloat16 else jnp.float32
    scale_c = (1.0 / std.astype(jnp.float32))
    bias_c = (-mean.astype(jnp.float32)) * scale_c
    scale_rows = jnp.repeat(jnp.tile(scale_c, N), rep).reshape(rows, 1).astype(const_dtype)
    bias_rows = jnp.repeat(jnp.tile(bias_c, N), rep).reshape(rows, 1).astype(const_dtype)

    rb, lb = _pick_block(rows, lanes, itemsize,
                         target_bytes=target_bytes,
                         vmem_budget_bytes=vmem_budget)
    grid = (pl.cdiv(rows, rb), pl.cdiv(lanes, lb))

    total_bytes = img.size * itemsize
    cost = pl.CostEstimate(
        flops=2 * img.size,                              # one fused mul+add per element
        transcendentals=0,
        bytes_accessed=2 * total_bytes + 2 * rows * 2 * 4,
    )

    kwargs = {}
    if donate:
        kwargs["input_output_aliases"] = {2: 0}          # img2d is operand index 2

    out2d = pl.pallas_call(
        _normalization_kernel,
        out_shape=jax.ShapeDtypeStruct((rows, lanes), img.dtype),
        grid=grid,
        in_specs=[
            pl.BlockSpec((rb, 1), lambda i, j: (i, 0)),   # per-row scale
            pl.BlockSpec((rb, 1), lambda i, j: (i, 0)),   # per-row bias
            pl.BlockSpec((rb, lb), lambda i, j: (i, j)),  # image tile
        ],
        out_specs=pl.BlockSpec((rb, lb), lambda i, j: (i, j)),
        compiler_params=pltpu.CompilerParams(
            dimension_semantics=("parallel", "parallel"),
            vmem_limit_bytes=int(vmem_limit),
        ),
        cost_estimate=cost,
        **kwargs,
    )(scale_rows, bias_rows, img2d)

    return out2d.reshape(N, C, H, W)


# --------------------------------------------------------------------------- #
# Self-test.
# --------------------------------------------------------------------------- #
if __name__ == "__main__":
    key = jax.random.PRNGKey(0)

    N, C, H, W = 2, 4, 16, 16
    img = jax.random.uniform(key, (N, C, H, W), dtype=jnp.float32)

    # Deterministic per-channel mean/std (shapes implied by mean.view(-1,1,1)).
    mean = jnp.array([0.485, 0.456, 0.406, 0.500], dtype=jnp.float32)
    std = jnp.array([0.229, 0.224, 0.225, 0.250], dtype=jnp.float32)

    out = normalization(img, mean, std)
    out = jax.block_until_ready(out)

    # Pure-JAX reference (same broadcasting as PyTorch's view(-1,1,1)).
    ref = (img - mean[None, :, None, None]) / std[None, :, None, None]

    assert out.shape == img.shape and out.dtype == img.dtype
    assert jnp.allclose(out, ref, atol=1e-5, rtol=1e-5)

    print("KERNEL_OK")
</pallas_src>

<mosaic_0001>
module attributes {stable_mosaic.version = 11 : i64} {
  func.func @_normalization_kernel(%arg0: i32, %arg1: i32, %arg2: memref<8x1xf32, #tpu.memory_space<vmem>>, %arg3: memref<8x1xf32, #tpu.memory_space<vmem>>, %arg4: memref<8x256xf32, #tpu.memory_space<vmem>>, %arg5: memref<8x256xf32, #tpu.memory_space<vmem>>) attributes {dimension_semantics = [#tpu.dimension_semantics<parallel>, #tpu.dimension_semantics<parallel>], iteration_bounds = array<i64: 1, 1>, scalar_prefetch = 0 : i64, scratch_operands = 0 : i64, tpu.core_type = #tpu.core_type<tc>, window_params = [{transform_indices = @transform_0, window_bounds = array<i64: 8, 1>}, {transform_indices = @transform_1, window_bounds = array<i64: 8, 1>}, {transform_indices = @transform_2, window_bounds = array<i64: 8, 256>}, {transform_indices = @transform_3, window_bounds = array<i64: 8, 256>}]} {
    %c0 = arith.constant 0 : index
    %c0_0 = arith.constant 0 : index
    %0 = vector.load %arg4[%c0, %c0_0] : memref<8x256xf32, #tpu.memory_space<vmem>>, vector<8x256xf32>
    %c0_1 = arith.constant 0 : index
    %c0_2 = arith.constant 0 : index
    %1 = vector.load %arg2[%c0_1, %c0_2] : memref<8x1xf32, #tpu.memory_space<vmem>>, vector<8x1xf32>
    %2 = vector.broadcast %1 : vector<8x1xf32> to vector<8x256xf32>
    %3 = arith.mulf %0, %2 : vector<8x256xf32>
    %c0_3 = arith.constant 0 : index
    %c0_4 = arith.constant 0 : index
    %4 = vector.load %arg3[%c0_3, %c0_4] : memref<8x1xf32, #tpu.memory_space<vmem>>, vector<8x1xf32>
    %5 = vector.broadcast %4 : vector<8x1xf32> to vector<8x256xf32>
    %6 = arith.addf %3, %5 : vector<8x256xf32>
    %c0_5 = arith.constant 0 : index
    %c0_6 = arith.constant 0 : index
    %7 = vector.load %arg5[%c0_5, %c0_6] : memref<8x256xf32, #tpu.memory_space<vmem>>, vector<8x256xf32>
    tpu.vector_store %arg5[%c0_5, %c0_6], %6 {strides = array<i32>} : memref<8x256xf32, #tpu.memory_space<vmem>>, vector<8x256xf32>,
    return
  }
  func.func @transform_0(%arg0: i32, %arg1: i32) -> (i32, i32) {
    %c0_i32 = arith.constant 0 : i32
    %c0_i32_0 = arith.constant 0 : i32
    return %arg0, %c0_i32 : i32, i32
  }
  func.func @transform_1(%arg0: i32, %arg1: i32) -> (i32, i32) {
    %c0_i32 = arith.constant 0 : i32
    %c0_i32_0 = arith.constant 0 : i32
    return %arg0, %c0_i32 : i32, i32
  }
  func.func @transform_2(%arg0: i32, %arg1: i32) -> (i32, i32) {
    %c0_i32 = arith.constant 0 : i32
    return %arg0, %arg1 : i32, i32
  }
  func.func @transform_3(%arg0: i32, %arg1: i32) -> (i32, i32) {
    %c0_i32 = arith.constant 0 : i32
    return %arg0, %arg1 : i32, i32
  }
}

</mosaic_0001>

<llo_original>
// kernel: tpu_custom_call.1
$region0: #{tpu_custom_call.1}
  #allocation0 [shape = 'u32[]', space=smem, size = 0x4, offset = 0x4, fixed_abs, tag = 'smem constant byte address 0x4 - core index']
  #allocation1 [shape = 'u32[144,128]{1,0:T(1,128)}', space=vmem, size = 0x12000, scoped, tag = 'internal scratch']
  %s0 = inlined_call_operand.vmem [shape: f32[8,1], index: 0, kind: input, shape index: {}]
  %s1 = inlined_call_operand.vmem [shape: f32[8,1], index: 1, kind: input, shape index: {}]
  %s2 = inlined_call_operand.vmem [shape: f32[8,256], index: 2, kind: input, shape index: {}]
  %s3 = inlined_call_operand.hbm [shape: f32[8,256], index: 3, kind: output, shape index: {}]
  %s4 = sld [smem:[#allocation0]]
  $region22: #{tpu_custom_call.1} parent=0
    _
  %s6 = ssub.s32 1, %s4
  %s7 = scalar_select 0, %s6, %s4
  $region1: #{tpu_custom_call.1} parent=0
    #allocation2 [shape = 'u8[8192]{0}', space=vmem, size = 0x2000, scoped, tag = 'output window, operand 0, single buffered']
    #allocation3 [shape = 's32[1]{0}', space=sflag, size = 0x4, scoped, tag = 'scoped memory for tpu_custom_call.1']
    %8 = vsyncpa [#allocation3], 0
    // Predicated region
    $region2: #{tpu_custom_call.1} parent=1 // pred_check
      _
    $region3: #{tpu_custom_call.1} parent=1 // pred_check_branch
      %10 = sbr.rel (0) target = $region5
    $region4: #{tpu_custom_call.1} parent=1 // pred_region
      _
    $region5: #{tpu_custom_call.1} parent=1 // pred_fallthru
      _
    // Predicated region
    $region6: #{tpu_custom_call.1} parent=1 // pred_check
      _
    $region7: #{tpu_custom_call.1} parent=1 // pred_check_branch
      %12 = sbr.rel (0) target = $region9
    $region8: #{tpu_custom_call.1} parent=1 // pred_region
      _
    $region9: #{tpu_custom_call.1} parent=1 // pred_fallthru
      _
    // Predicated region
    $region10: #{tpu_custom_call.1} parent=1 // pred_check
      _
    $region11: #{tpu_custom_call.1} parent=1 // pred_check_branch
      %14 = sbr.rel (0) target = $region13
    $region12: #{tpu_custom_call.1} parent=1 // pred_region
      _
    $region13: #{tpu_custom_call.1} parent=1 // pred_fallthru
      _
    %v15 = vld [vmem:[%s2] sm:$0xff]
    %v16 = vld [vmem:[%s2 + $0x8] sm:$0xff]
    %v17 = vld [vmem:[%s0] sm:$0xff]
    %19 = vset.pattern.permute.xlu0 0
    %20 = vperm.xlu0 %19, %v17
    %v21 = vpop.permute.xlu0 %20
    %v23 = vmul.f32 %v15, %v21
    %v24 = vmul.f32 %v16, %v21
    %v25 = vld [vmem:[%s1] sm:$0xff]
    %27 = vset.pattern.permute.xlu0 0
    %28 = vperm.xlu0 %27, %v25
    %v29 = vpop.permute.xlu0 %28
    %v31 = vadd.f32 %v23, %v29
    %v32 = vadd.f32 %v24, %v29
    %33 = vst [vmem:[#allocation2] sm:$0xff] %v31
    %34 = vst [vmem:[#allocation2 + $0x8] sm:$0xff] %v32
    // Predicated region
    $region14: #{tpu_custom_call.1} parent=1 // pred_check
      _
    $region15: #{tpu_custom_call.1} parent=1 // pred_check_branch
      %36 = sbr.rel (0) target = $region17
    $region16: #{tpu_custom_call.1} parent=1 // pred_region
      %s38 = ssub.s32 256, 256
      %39 = vsyncadd [#allocation3], %s38
      %s41 = sshll.u32 [#allocation2], 4
      %s42 = int_to_ptr.vmem [resolvable:$true] %s41
      %44 = dma.vmem_to_hbm [thread:$0]  %s42, 256, %s3, [#allocation3]
    $region17: #{tpu_custom_call.1} parent=1 // pred_fallthru
      _
    // Predicated region
    $region18: #{tpu_custom_call.1} parent=1 // pred_check
      _
    $region19: #{tpu_custom_call.1} parent=1 // pred_check_branch
      %46 = sbr.rel (0) target = $region21
    $region20: #{tpu_custom_call.1} parent=1 // pred_region
      %47 = dma.done [#allocation3], 256
    $region21: #{tpu_custom_call.1} parent=1 // pred_fallthru
      _
    %48 = vsyncpa [#allocation3], 1

</llo_original>
